<compile_context>
chip_gen: v5e
topology: v5e:2x2
jax: 0.10.0
libtpu: 0.0.40
codegen_flags: <defaults>
</compile_context>

<pallas_src>
import jax
import jax.numpy as jnp
from jax.experimental import pallas as pl
from jax.experimental.pallas import tpu as pltpu


def critic_kernel(s_ref, a_ref, w1s_ref, w1a_ref, b1_ref, w2_ref, b2_ref,
                  w3_ref, b3_ref, q_ref):
    """One batch tile of the critic forward; everything resident in VMEM.

    s_ref:(TB,OBS) a_ref:(TB,ACT) w1s_ref:(OBS,H) w1a_ref:(ACT,H) b1_ref:(1,H)
    w2_ref:(H,H) b2_ref:(1,H) w3_ref:(1,H) b3_ref:(1,1) q_ref:(1,1,TB)
    """
    wdt = w1s_ref.dtype                      # MXU operand dtype (weights pre-cast)
    s = s_ref[...].astype(wdt)               # no-op if inputs already match; also
    a = a_ref[...].astype(wdt)               # accepts bf16-streamed inputs

    # fc1 with the concat fused algebraically: [s; a] @ W1 = s @ W1[:OBS] + a @ W1[OBS:]
    h1 = (jnp.dot(s, w1s_ref[...], preferred_element_type=jnp.float32)
          + jnp.dot(a, w1a_ref[...], preferred_element_type=jnp.float32)
          + b1_ref[...])
    h1 = jnp.maximum(h1, 0.0)                # bias/ReLU in f32 (v5e VPU has no bf16)

    h2 = jnp.dot(h1.astype(wdt), w2_ref[...],
                 preferred_element_type=jnp.float32) + b2_ref[...]
    h2 = jnp.maximum(h2, 0.0)

    # q head (64 -> 1), computed transposed so the result is lane-major:
    #   q_row (1, TB) = w3_row (1, 64) @ h2^T (64, TB)   [+ b3]
    # MXU work is tiny (64*TB MACs) and the MXU has slack; the payoff is a dense
    # (1, TB) store + dense output DMA instead of a masked (TB, 1) column.
    q_row = jnp.dot(w3_ref[...], h2.T,
                    preferred_element_type=jnp.float32) + b3_ref[...]
    q_ref[...] = q_row[None].astype(q_ref.dtype)          # (1, 1, TB)


def prepare_params(params, obs_dim, *, weight_dtype=jnp.float32):
    """Split/reshape/cast PyTorch-layout params once (outside the hot path)."""
    w1, b1, w2, b2, w3, b3 = params
    w1s = w1[:obs_dim].astype(weight_dtype)          # (OBS, H)
    w1a = w1[obs_dim:].astype(weight_dtype)          # (ACT, H)
    w2c = w2.astype(weight_dtype)                    # (H, H)
    b1r = b1.reshape(1, -1).astype(jnp.float32)      # (1, H)
    b2r = b2.reshape(1, -1).astype(jnp.float32)      # (1, H)
    w3_row = w3.reshape(1, -1).astype(jnp.float32)   # (1, H) row for the head
    b3r = b3.reshape(1, 1).astype(jnp.float32)       # (1, 1)
    return (w1s, w1a, b1r, w2c, b2r, w3_row, b3r)


def _round_up(x, m):
    return ((x + m - 1) // m) * m


def critic_forward(state, action, prepared_params, *, block_b=2048,
                   vmem_limit_bytes=None):
    """state: (B, OBS), action: (B, ACT) -> q: (B, 1)."""
    w1s, w1a, b1, w2, b2, w3_row, b3 = prepared_params
    B, obs_dim = state.shape
    act_dim = action.shape[1]

    # Batch tiling: small B -> single full-extent block (exempt from the 8-row rule);
    # large B -> 8-aligned tiles, ragged last tile handled by Pallas boundary
    # semantics (no jnp.pad copy of the inputs, no padded output allocation).
    if B <= block_b:
        tb = B
    else:
        tb = _round_up(block_b, 8)
    nt = pl.cdiv(B, tb)

    def resident(shape):
        # Full-extent block whose block index never changes -> stays resident in VMEM.
        return pl.BlockSpec(shape, lambda i, _s=shape: (0,) * len(_s))

    q_tiles = pl.pallas_call(
        critic_kernel,
        out_shape=jax.ShapeDtypeStruct((nt, 1, tb), jnp.float32),
        grid_spec=pltpu.PrefetchScalarGridSpec(
            num_scalar_prefetch=0,
            grid=(nt,),
            in_specs=[
                pl.BlockSpec((tb, obs_dim), lambda i: (i, 0)),   # state tile
                pl.BlockSpec((tb, act_dim), lambda i: (i, 0)),   # action tile
                resident(w1s.shape),
                resident(w1a.shape),
                resident(b1.shape),
                resident(w2.shape),
                resident(b2.shape),
                resident(w3_row.shape),
                resident(b3.shape),
            ],
            # Lane-dense output: block (1, 1, tb) == full extent of the last two dims.
            out_specs=pl.BlockSpec((1, 1, tb), lambda i: (i, 0, 0)),
        ),
        compiler_params=pltpu.CompilerParams(
            dimension_semantics=("parallel",),        # batch tiles shard across TCs
            vmem_limit_bytes=vmem_limit_bytes),
    )(state, action, w1s, w1a, b1, w2, b2, w3_row, b3)

    # Output is tiny (B floats): flatten, drop the ragged-tile tail, reshape to (B,1).
    q = q_tiles.reshape(-1)
    if nt * tb != B:
        q = q[:B]
    return q.reshape(B, 1)


def init_linear(key, fan_in, fan_out):
    """nn.Linear default init: U(-1/sqrt(fan_in), 1/sqrt(fan_in)).
    Returns weight as (in, out) and bias as (out,)."""
    kw, kb = jax.random.split(key)
    bound = 1.0 / jnp.sqrt(jnp.float32(fan_in))
    w = jax.random.uniform(kw, (fan_in, fan_out), jnp.float32, -bound, bound)
    b = jax.random.uniform(kb, (fan_out,), jnp.float32, -bound, bound)
    return w, b


def reference_forward(state, action, params):
    w1, b1, w2, b2, w3, b3 = params
    x = jnp.concatenate([state.astype(jnp.float32), action.astype(jnp.float32)], axis=1)
    h1 = jax.nn.relu(x @ w1 + b1)
    h2 = jax.nn.relu(h1 @ w2 + b2)
    return h2 @ w3 + b3


if __name__ == "__main__":
    # Small shapes consistent with the module: obs_shape=24, action_shape=8, hidden=64.
    B, OBS, ACT, HID = 4, 24, 8, 64

    key = jax.random.PRNGKey(0)
    k_state, k_action, k1, k2, k3, k_s2, k_a2 = jax.random.split(key, 7)

    state = jax.random.normal(k_state, (B, OBS), jnp.float32)
    action = jax.random.normal(k_action, (B, ACT), jnp.float32)

    w1, b1 = init_linear(k1, OBS + ACT, HID)   # fc1: (obs+act) -> 64
    w2, b2 = init_linear(k2, HID, HID)         # fc2: 64 -> 64
    w3, b3 = init_linear(k3, HID, 1)           # q_out: 64 -> 1
    params = (w1, b1, w2, b2, w3, b3)
    kparams = prepare_params(params, OBS)      # split W1 / reshape W3 / cast once

    # 1) Small-batch path: single full-extent block, no concat, lane-dense output.
    q = jax.block_until_ready(critic_forward(state, action, kparams))
    q_ref = reference_forward(state, action, params)
    assert q.shape == (B, 1)
    assert jnp.allclose(q, q_ref, atol=1e-5, rtol=1e-5), (q, q_ref)

    # 2) Tiled batch grid with a ragged (masked-boundary) last tile — exercises the
    #    no-pad path, parallel semantics and the (nt, 1, tb) lane-dense output.
    B2 = 12
    state2 = jax.random.normal(k_s2, (B2, OBS), jnp.float32)
    action2 = jax.random.normal(k_a2, (B2, ACT), jnp.float32)
    q2 = jax.block_until_ready(critic_forward(state2, action2, kparams, block_b=8))
    q2_ref = reference_forward(state2, action2, params)
    assert q2.shape == (B2, 1)
    assert jnp.allclose(q2, q2_ref, atol=1e-5, rtol=1e-5), (q2, q2_ref)

    # 3) bf16-streamed inputs (halves input HBM traffic); weights/compute stay f32,
    #    so the result matches the reference evaluated on the same bf16-rounded inputs.
    state_bf = state.astype(jnp.bfloat16)
    action_bf = action.astype(jnp.bfloat16)
    q3 = jax.block_until_ready(critic_forward(state_bf, action_bf, kparams))
    q3_ref = reference_forward(state_bf, action_bf, params)
    assert jnp.allclose(q3, q3_ref, atol=1e-4, rtol=1e-4), (q3, q3_ref)

    print("KERNEL_OK")
</pallas_src>

<mosaic_0001>
module attributes {stable_mosaic.version = 11 : i64} {
  func.func @critic_kernel(%arg0: i32, %arg1: memref<4x24xf32, #tpu.memory_space<vmem>>, %arg2: memref<4x8xf32, #tpu.memory_space<vmem>>, %arg3: memref<24x64xf32, #tpu.memory_space<vmem>>, %arg4: memref<8x64xf32, #tpu.memory_space<vmem>>, %arg5: memref<1x64xf32, #tpu.memory_space<vmem>>, %arg6: memref<64x64xf32, #tpu.memory_space<vmem>>, %arg7: memref<1x64xf32, #tpu.memory_space<vmem>>, %arg8: memref<1x64xf32, #tpu.memory_space<vmem>>, %arg9: memref<1x1xf32, #tpu.memory_space<vmem>>, %arg10: memref<1x1x4xf32, #tpu.memory_space<vmem>>) attributes {dimension_semantics = [#tpu.dimension_semantics<parallel>], iteration_bounds = array<i64: 1>, scalar_prefetch = 0 : i64, scratch_operands = 0 : i64, tpu.core_type = #tpu.core_type<tc>, window_params = [{transform_indices = @transform_0, window_bounds = array<i64: 4, 24>}, {transform_indices = @transform_1, window_bounds = array<i64: 4, 8>}, {pipeline_mode = #tpu.pipeline_mode<synchronous>, transform_indices = @transform_2, window_bounds = array<i64: 24, 64>}, {pipeline_mode = #tpu.pipeline_mode<synchronous>, transform_indices = @transform_3, window_bounds = array<i64: 8, 64>}, {pipeline_mode = #tpu.pipeline_mode<synchronous>, transform_indices = @transform_4, window_bounds = array<i64: 1, 64>}, {pipeline_mode = #tpu.pipeline_mode<synchronous>, transform_indices = @transform_5, window_bounds = array<i64: 64, 64>}, {pipeline_mode = #tpu.pipeline_mode<synchronous>, transform_indices = @transform_6, window_bounds = array<i64: 1, 64>}, {pipeline_mode = #tpu.pipeline_mode<synchronous>, transform_indices = @transform_7, window_bounds = array<i64: 1, 64>}, {pipeline_mode = #tpu.pipeline_mode<synchronous>, transform_indices = @transform_8, window_bounds = array<i64: 1, 1>}, {transform_indices = @transform_9, window_bounds = array<i64: 1, 1, 4>}]} {
    %c0 = arith.constant 0 : index
    %c0_0 = arith.constant 0 : index
    %0 = vector.load %arg1[%c0, %c0_0] : memref<4x24xf32, #tpu.memory_space<vmem>>, vector<4x24xf32>
    %c0_1 = arith.constant 0 : index
    %c0_2 = arith.constant 0 : index
    %1 = vector.load %arg2[%c0_1, %c0_2] : memref<4x8xf32, #tpu.memory_space<vmem>>, vector<4x8xf32>
    %c0_3 = arith.constant 0 : index
    %c0_4 = arith.constant 0 : index
    %2 = vector.load %arg3[%c0_3, %c0_4] : memref<24x64xf32, #tpu.memory_space<vmem>>, vector<24x64xf32>
    %cst = arith.constant dense<0.000000e+00> : vector<4x64xf32>
    %3 = tpu.matmul %0, %2, %cst {dimension_numbers = #tpu.dot_dimension_numbers<[1], [0], [0], [1], [0, 0, 1, 1], [], []>} : vector<4x24xf32>, vector<24x64xf32>, vector<4x64xf32> -> vector<4x64xf32>
    %c0_5 = arith.constant 0 : index
    %c0_6 = arith.constant 0 : index
    %4 = vector.load %arg4[%c0_5, %c0_6] : memref<8x64xf32, #tpu.memory_space<vmem>>, vector<8x64xf32>
    %cst_7 = arith.constant dense<0.000000e+00> : vector<4x64xf32>
    %5 = tpu.matmul %1, %4, %cst_7 {dimension_numbers = #tpu.dot_dimension_numbers<[1], [0], [0], [1], [0, 0, 1, 1], [], []>} : vector<4x8xf32>, vector<8x64xf32>, vector<4x64xf32> -> vector<4x64xf32>
    %6 = arith.addf %3, %5 : vector<4x64xf32>
    %c0_8 = arith.constant 0 : index
    %c0_9 = arith.constant 0 : index
    %7 = vector.load %arg5[%c0_8, %c0_9] : memref<1x64xf32, #tpu.memory_space<vmem>>, vector<1x64xf32>
    %8 = vector.broadcast %7 : vector<1x64xf32> to vector<4x64xf32>
    %9 = arith.addf %6, %8 : vector<4x64xf32>
    %cst_10 = arith.constant 0.000000e+00 : f32
    %10 = vector.broadcast %cst_10 : f32 to vector<4x64xf32>
    %11 = arith.maximumf %9, %10 : vector<4x64xf32>
    %c0_11 = arith.constant 0 : index
    %c0_12 = arith.constant 0 : index
    %12 = vector.load %arg6[%c0_11, %c0_12] : memref<64x64xf32, #tpu.memory_space<vmem>>, vector<64x64xf32>
    %cst_13 = arith.constant dense<0.000000e+00> : vector<4x64xf32>
    %13 = tpu.matmul %11, %12, %cst_13 {dimension_numbers = #tpu.dot_dimension_numbers<[1], [0], [0], [1], [0, 0, 1, 1], [], []>} : vector<4x64xf32>, vector<64x64xf32>, vector<4x64xf32> -> vector<4x64xf32>
    %c0_14 = arith.constant 0 : index
    %c0_15 = arith.constant 0 : index
    %14 = vector.load %arg7[%c0_14, %c0_15] : memref<1x64xf32, #tpu.memory_space<vmem>>, vector<1x64xf32>
    %15 = vector.broadcast %14 : vector<1x64xf32> to vector<4x64xf32>
    %16 = arith.addf %13, %15 : vector<4x64xf32>
    %cst_16 = arith.constant 0.000000e+00 : f32
    %17 = vector.broadcast %cst_16 : f32 to vector<4x64xf32>
    %18 = arith.maximumf %16, %17 : vector<4x64xf32>
    %c0_17 = arith.constant 0 : index
    %c0_18 = arith.constant 0 : index
    %19 = vector.load %arg8[%c0_17, %c0_18] : memref<1x64xf32, #tpu.memory_space<vmem>>, vector<1x64xf32>
    %20 = tpu.transpose %18, [1, 0] : vector<4x64xf32> -> vector<64x4xf32>
    %cst_19 = arith.constant dense<0.000000e+00> : vector<1x4xf32>
    %21 = tpu.matmul %19, %20, %cst_19 {dimension_numbers = #tpu.dot_dimension_numbers<[1], [0], [0], [1], [0, 0, 1, 1], [], []>} : vector<1x64xf32>, vector<64x4xf32>, vector<1x4xf32> -> vector<1x4xf32>
    %c0_20 = arith.constant 0 : index
    %c0_21 = arith.constant 0 : index
    %22 = vector.load %arg9[%c0_20, %c0_21] : memref<1x1xf32, #tpu.memory_space<vmem>>, vector<1x1xf32>
    %23 = vector.broadcast %22 : vector<1x1xf32> to vector<1x4xf32>
    %24 = arith.addf %21, %23 : vector<1x4xf32>
    %25 = vector.shape_cast %24 : vector<1x4xf32> to vector<1x1x4xf32>
    %c0_22 = arith.constant 0 : index
    %c0_23 = arith.constant 0 : index
    %c0_24 = arith.constant 0 : index
    %26 = vector.load %arg10[%c0_22, %c0_23, %c0_24] : memref<1x1x4xf32, #tpu.memory_space<vmem>>, vector<1x1x4xf32>
    tpu.vector_store %arg10[%c0_22, %c0_23, %c0_24], %25 {strides = array<i32>} : memref<1x1x4xf32, #tpu.memory_space<vmem>>, vector<1x1x4xf32>,
    return
  }
  func.func @transform_0(%arg0: i32) -> (i32, i32) {
    %c0_i32 = arith.constant 0 : i32
    %c0_i32_0 = arith.constant 0 : i32
    return %arg0, %c0_i32 : i32, i32
  }
  func.func @transform_1(%arg0: i32) -> (i32, i32) {
    %c0_i32 = arith.constant 0 : i32
    %c0_i32_0 = arith.constant 0 : i32
    return %arg0, %c0_i32 : i32, i32
  }
  func.func @transform_2(%arg0: i32) -> (i32, i32) {
    %c0_i32 = arith.constant 0 : i32
    %c0_i32_0 = arith.constant 0 : i32
    %c0_i32_1 = arith.constant 0 : i32
    return %c0_i32, %c0_i32_0 : i32, i32
  }
  func.func @transform_3(%arg0: i32) -> (i32, i32) {
    %c0_i32 = arith.constant 0 : i32
    %c0_i32_0 = arith.constant 0 : i32
    %c0_i32_1 = arith.constant 0 : i32
    return %c0_i32, %c0_i32_0 : i32, i32
  }
  func.func @transform_4(%arg0: i32) -> (i32, i32) {
    %c0_i32 = arith.constant 0 : i32
    %c0_i32_0 = arith.constant 0 : i32
    %c0_i32_1 = arith.constant 0 : i32
    return %c0_i32, %c0_i32_0 : i32, i32
  }
  func.func @transform_5(%arg0: i32) -> (i32, i32) {
    %c0_i32 = arith.constant 0 : i32
    %c0_i32_0 = arith.constant 0 : i32
    %c0_i32_1 = arith.constant 0 : i32
    return %c0_i32, %c0_i32_0 : i32, i32
  }
  func.func @transform_6(%arg0: i32) -> (i32, i32) {
    %c0_i32 = arith.constant 0 : i32
    %c0_i32_0 = arith.constant 0 : i32
    %c0_i32_1 = arith.constant 0 : i32
    return %c0_i32, %c0_i32_0 : i32, i32
  }
  func.func @transform_7(%arg0: i32) -> (i32, i32) {
    %c0_i32 = arith.constant 0 : i32
    %c0_i32_0 = arith.constant 0 : i32
    %c0_i32_1 = arith.constant 0 : i32
    return %c0_i32, %c0_i32_0 : i32, i32
  }
  func.func @transform_8(%arg0: i32) -> (i32, i32) {
    %c0_i32 = arith.constant 0 : i32
    %c0_i32_0 = arith.constant 0 : i32
    %c0_i32_1 = arith.constant 0 : i32
    return %c0_i32, %c0_i32_0 : i32, i32
  }
  func.func @transform_9(%arg0: i32) -> (i32, i32, i32) {
    %c0_i32 = arith.constant 0 : i32
    %c0_i32_0 = arith.constant 0 : i32
    %c0_i32_1 = arith.constant 0 : i32
    return %arg0, %c0_i32, %c0_i32_0 : i32, i32, i32
  }
}

</mosaic_0001>

<llo_original>
// kernel: tpu_custom_call.1
$region0: #{tpu_custom_call.1}
  #allocation0 [shape = 'u32[]', space=smem, size = 0x4, offset = 0x4, fixed_abs, tag = 'smem constant byte address 0x4 - core index']
  #allocation1 [shape = 'u32[72,128]{1,0:T(1,128)}', space=vmem, size = 0x9000, scoped, tag = 'internal scratch']
  #allocation2 [shape = 'f32[1,1]{1,0:T(1,128)S(1)}', space=vmem, size = 0x200, scoped, tag = 'scoped memory for tpu_custom_call.1']
  %s0 = inlined_call_operand.hbm [shape: f32[4,24], index: 0, kind: input, shape index: {}]
  %s1 = inlined_call_operand.hbm [shape: f32[4,8], index: 1, kind: input, shape index: {}]
  %s2 = inlined_call_operand.hbm [shape: f32[24,64], index: 2, kind: input, shape index: {}]
  %s3 = inlined_call_operand.hbm [shape: f32[8,64], index: 3, kind: input, shape index: {}]
  %s4 = inlined_call_operand.vmem [shape: f32[1,64], index: 4, kind: input, shape index: {}]
  %s5 = inlined_call_operand.hbm [shape: f32[64,64], index: 5, kind: input, shape index: {}]
  %s6 = inlined_call_operand.vmem [shape: f32[1,64], index: 6, kind: input, shape index: {}]
  %s7 = inlined_call_operand.vmem [shape: f32[1,64], index: 7, kind: input, shape index: {}]
  %s8 = inlined_call_operand.<no memory space> [shape: f32[1,1], index: 8, kind: input, shape index: {}]
  %s9 = inlined_call_operand.hbm [shape: f32[1,1,4], index: 9, kind: output, shape index: {}]
  %s10 = sld [smem:[#allocation0]]
  $region66: #{tpu_custom_call.1} parent=0
    _
  %s12 = ssub.s32 1, %s10
  %s13 = scalar_select 0, %s12, %s10
  %v14 = vstv %s8
  %15 = vst [vmem:[#allocation2] sm:$0x1] %v14
  $region1: #{tpu_custom_call.1} parent=0
    #allocation3 [shape = 'u8[2048]{0}', space=vmem, size = 0x800, scoped, tag = 'input window, operand 0, single buffered']
    #allocation4 [shape = 's32[1]{0}', space=sflag, size = 0x4, scoped, tag = 'scoped memory for tpu_custom_call.1']
    #allocation5 [shape = 's32[1]{0}', space=sflag, size = 0x4, scoped, tag = 'scoped memory for tpu_custom_call.1']
    #allocation6 [shape = 'u8[2048]{0}', space=vmem, size = 0x800, scoped, tag = 'input window, operand 1, single buffered']
    #allocation7 [shape = 's32[1]{0}', space=sflag, size = 0x4, scoped, tag = 'scoped memory for tpu_custom_call.1']
    #allocation8 [shape = 'u8[12288]{0}', space=vmem, size = 0x3000, scoped, tag = 'input window, operand 2, single buffered']
    #allocation9 [shape = 'u8[4096]{0}', space=vmem, size = 0x1000, scoped, tag = 'input window, operand 3, single buffered']
    #allocation10 [shape = 's32[1]{0}', space=sflag, size = 0x4, scoped, tag = 'scoped memory for tpu_custom_call.1']
    #allocation11 [shape = 'u8[32768]{0}', space=vmem, size = 0x8000, scoped, tag = 'input window, operand 5, single buffered']
    #allocation12 [shape = 'u8[512]{0}', space=vmem, size = 0x400, scoped, tag = 'output window, operand 0, single buffered']
    %16 = vsyncpa [#allocation4], 0
    %17 = vsyncpa [#allocation7], 0
    %18 = vsyncpa [#allocation10], 0
    %19 = vsyncpa [#allocation5], 0
    // Predicated region
    $region2: #{tpu_custom_call.1} parent=1 // pred_check
      _
    $region3: #{tpu_custom_call.1} parent=1 // pred_check_branch
      %21 = sbr.rel (0) target = $region5
    $region4: #{tpu_custom_call.1} parent=1 // pred_region
      %23 = vsyncadd [#allocation4], 0
      %s25 = sshll.u32 %s0, 4
      %s26 = int_to_ptr.hbm [resolvable:$true] %s25
      %s27 = sshll.u32 [#allocation3], 4
      %s28 = int_to_ptr.vmem [resolvable:$true] %s27
      %30 = dma.hbm_to_vmem [thread:$0]  %s26, 64, %s28, [#allocation4]
    $region5: #{tpu_custom_call.1} parent=1 // pred_fallthru
      _
    // Predicated region
    $region6: #{tpu_custom_call.1} parent=1 // pred_check
      _
    $region7: #{tpu_custom_call.1} parent=1 // pred_check_branch
      %32 = sbr.rel (0) target = $region9
    $region8: #{tpu_custom_call.1} parent=1 // pred_region
      %34 = vsyncadd [#allocation7], 0
      %s36 = sshll.u32 %s1, 4
      %s37 = int_to_ptr.hbm [resolvable:$true] %s36
      %s38 = sshll.u32 [#allocation6], 4
      %s39 = int_to_ptr.vmem [resolvable:$true] %s38
      %41 = dma.hbm_to_vmem [thread:$0]  %s37, 64, %s39, [#allocation7]
    $region9: #{tpu_custom_call.1} parent=1 // pred_fallthru
      _
    // Predicated region
    $region10: #{tpu_custom_call.1} parent=1 // pred_check
      _
    $region11: #{tpu_custom_call.1} parent=1 // pred_check_branch
      %43 = sbr.rel (0) target = $region13
    $region12: #{tpu_custom_call.1} parent=1 // pred_region
      %45 = vsyncadd [#allocation7], 0
      %s46 = sshll.u32 %s2, 4
      %s47 = int_to_ptr.hbm [resolvable:$true] %s46
      %s48 = sshll.u32 [#allocation8], 4
      %s49 = int_to_ptr.vmem [resolvable:$true] %s48
      %54 = dma.hbm_to_vmem [thread:$0]  %s47, 384, %s49, [#allocation7], 128, 128, 8
    $region13: #{tpu_custom_call.1} parent=1 // pred_fallthru
      _
    // Predicated region
    $region14: #{tpu_custom_call.1} parent=1 // pred_check
      _
    $region15: #{tpu_custom_call.1} parent=1 // pred_check_branch
      %56 = sbr.rel (0) target = $region17
    $region16: #{tpu_custom_call.1} parent=1 // pred_region
      %58 = vsyncadd [#allocation10], 0
      %s60 = sshll.u32 %s3, 4
      %s61 = int_to_ptr.hbm [resolvable:$true] %s60
      %s62 = sshll.u32 [#allocation9], 4
      %s63 = int_to_ptr.vmem [resolvable:$true] %s62
      %65 = dma.hbm_to_vmem [thread:$0]  %s61, 128, %s63, [#allocation10]
    $region17: #{tpu_custom_call.1} parent=1 // pred_fallthru
      _
    // Predicated region
    $region18: #{tpu_custom_call.1} parent=1 // pred_check
      _
    $region19: #{tpu_custom_call.1} parent=1 // pred_check_branch
      %67 = sbr.rel (0) target = $region21
    $region20: #{tpu_custom_call.1} parent=1 // pred_region
      _
    $region21: #{tpu_custom_call.1} parent=1 // pred_fallthru
      _
    // Predicated region
    $region22: #{tpu_custom_call.1} parent=1 // pred_check
      _
    $region23: #{tpu_custom_call.1} parent=1 // pred_check_branch
      %69 = sbr.rel (0) target = $region25
    $region24: #{tpu_custom_call.1} parent=1 // pred_region
      %71 = vsyncadd [#allocation10], 0
      %s72 = sshll.u32 %s5, 4
      %s73 = int_to_ptr.hbm [resolvable:$true] %s72
      %s74 = sshll.u32 [#allocation11], 4
      %s75 = int_to_ptr.vmem [resolvable:$true] %s74
      %80 = dma.hbm_to_vmem [thread:$0]  %s73, 1024, %s75, [#allocation10], 128, 128, 8
    $region25: #{tpu_custom_call.1} parent=1 // pred_fallthru
      _
    // Predicated region
    $region26: #{tpu_custom_call.1} parent=1 // pred_check
      _
    $region27: #{tpu_custom_call.1} parent=1 // pred_check_branch
      %82 = sbr.rel (0) target = $region29
    $region28: #{tpu_custom_call.1} parent=1 // pred_region
      _
    $region29: #{tpu_custom_call.1} parent=1 // pred_fallthru
      _
    // Predicated region
    $region30: #{tpu_custom_call.1} parent=1 // pred_check
      _
    $region31: #{tpu_custom_call.1} parent=1 // pred_check_branch
      %84 = sbr.rel (0) target = $region33
    $region32: #{tpu_custom_call.1} parent=1 // pred_region
      _
    $region33: #{tpu_custom_call.1} parent=1 // pred_fallthru
      _
    // Predicated region
    $region34: #{tpu_custom_call.1} parent=1 // pred_check
      _
    $region35: #{tpu_custom_call.1} parent=1 // pred_check_branch
      %86 = sbr.rel (0) target = $region37
    $region36: #{tpu_custom_call.1} parent=1 // pred_region
      _
    $region37: #{tpu_custom_call.1} parent=1 // pred_fallthru
      _
    // Predicated region
    $region38: #{tpu_custom_call.1} parent=1 // pred_check
      _
    $region39: #{tpu_custom_call.1} parent=1 // pred_check_branch
      %88 = sbr.rel (0) target = $region41
    $region40: #{tpu_custom_call.1} parent=1 // pred_region
      %90 = dma.done [#allocation4], 64
    $region41: #{tpu_custom_call.1} parent=1 // pred_fallthru
      _
    // Predicated region
    $region42: #{tpu_custom_call.1} parent=1 // pred_check
      _
    $region43: #{tpu_custom_call.1} parent=1 // pred_check_branch
      %92 = sbr.rel (0) target = $region45
    $region44: #{tpu_custom_call.1} parent=1 // pred_region
      %94 = dma.done [#allocation7], 64
    $region45: #{tpu_custom_call.1} parent=1 // pred_fallthru
      _
    // Predicated region
    $region46: #{tpu_custom_call.1} parent=1 // pred_check
      _
    $region47: #{tpu_custom_call.1} parent=1 // pred_check_branch
      %96 = sbr.rel (0) target = $region49
    $region48: #{tpu_custom_call.1} parent=1 // pred_region
      %98 = dma.done [#allocation7], 384
    $region49: #{tpu_custom_call.1} parent=1 // pred_fallthru
      _
    // Predicated region
    $region50: #{tpu_custom_call.1} parent=1 // pred_check
      _
    $region51: #{tpu_custom_call.1} parent=1 // pred_check_branch
      %100 = sbr.rel (0) target = $region53
    $region52: #{tpu_custom_call.1} parent=1 // pred_region
      %102 = dma.done [#allocation10], 128
    $region53: #{tpu_custom_call.1} parent=1 // pred_fallthru
      _
    // Predicated region
    $region54: #{tpu_custom_call.1} parent=1 // pred_check
      _
    $region55: #{tpu_custom_call.1} parent=1 // pred_check_branch
      %104 = sbr.rel (0) target = $region57
    $region56: #{tpu_custom_call.1} parent=1 // pred_region
      %106 = dma.done [#allocation10], 1024
    $region57: #{tpu_custom_call.1} parent=1 // pred_fallthru
      _
    %v107 = vld [vmem:[#allocation3] sm:$0xf]
    %v108 = vld [vmem:[#allocation6] sm:$0xf]
    %v109 = vld [vmem:[#allocation8] sm:$0xff]
    %v110 = vld [vmem:[#allocation8 + $0x8] sm:$0xff]
    %v111 = vld [vmem:[#allocation8 + $0x10] sm:$0xff]
    %v112 = vld [vmem:[#allocation9] sm:$0xff]
    %vm113 = vcmask 64512
    %v115 = vsel %vm113, %v108, 0
    %117 = vmatpush.msra.mxu0 0.0
    %118 = vmatpush.msra.mxu0 0.0
    %119 = vmatpush.msra.mxu0 0.0
    %120 = vmatpush.msra.mxu0 0.0
    %121 = vmatpush.msra.mxu0 0.0
    %122 = vmatpush.msra.mxu0 0.0
    %123 = vmatpush.msra.mxu0 0.0
    %124 = vmatpush.msra.mxu0 0.0
    %125 = vmatpush.msra.mxu0 0.0
    %126 = vmatpush.msra.mxu0 0.0
    %127 = vmatpush.msra.mxu0 0.0
    %128 = vmatpush.msra.mxu0 0.0
    %129 = vmatpush.msra.mxu0 0.0
    %130 = vmatpush.msra.mxu0 0.0
    %131 = vmatpush.msra.mxu0 0.0
    %132 = vmatpush.msra.mxu0 %v112
    %133 = vmatmul.f32.gmra.mxu0 %v115
    %v134 = vpop.f32.mrf.mxu0
    %v135 = vadd.f32 0.0, %v134
    %136 = vdwg.mxu0
    %vm137 = vcmask 195584
    %v139 = vsel %vm137, %v107, 0
    %141 = vmatpush.msra.mxu0 0.0
    %142 = vmatpush.msra.mxu0 0.0
    %143 = vmatpush.msra.mxu0 0.0
    %144 = vmatpush.msra.mxu0 0.0
    %145 = vmatpush.msra.mxu0 0.0
    %146 = vmatpush.msra.mxu0 0.0
    %147 = vmatpush.msra.mxu0 0.0
    %148 = vmatpush.msra.mxu0 0.0
    %149 = vmatpush.msra.mxu0 0.0
    %150 = vmatpush.msra.mxu0 0.0
    %151 = vmatpush.msra.mxu0 0.0
    %152 = vmatpush.msra.mxu0 0.0
    %153 = vmatpush.msra.mxu0 0.0
    %154 = vmatpush.msra.mxu0 %v111
    %155 = vmatpush.msra.mxu0 %v110
    %156 = vmatpush.msra.mxu0 %v109
    %157 = vmatmul.f32.gmra.mxu0 %v139
    %v158 = vpop.f32.mrf.mxu0
    %v159 = vadd.f32 %v135, %v158
    %160 = vdwg.mxu0
    %v161 = vld [vmem:[%s4] sm:$0x1]
    %v163 = vperm.slane %v161, 0
    %v165 = vadd.f32 %v159, %v163
    %v166 = vmax.f32 %v165, 0.0
    %v167 = vld [vmem:[#allocation11] sm:$0xff]
    %v168 = vld [vmem:[#allocation11 + $0x8] sm:$0xff]
    %v169 = vld [vmem:[#allocation11 + $0x10] sm:$0xff]
    %v170 = vld [vmem:[#allocation11 + $0x18] sm:$0xff]
    %v171 = vld [vmem:[#allocation11 + $0x20] sm:$0xff]
    %v172 = vld [vmem:[#allocation11 + $0x28] sm:$0xff]
    %v173 = vld [vmem:[#allocation11 + $0x30] sm:$0xff]
    %v174 = vld [vmem:[#allocation11 + $0x38] sm:$0xff]
    %v175 = vld [vmem:[%s6] sm:$0x1]
    %v177 = vperm.slane %v175, 0
    %vm179 = vcmask 523264
    %v181 = vsel %vm179, %v166, 0
    %183 = vmatpush.msra.mxu0 0.0
    %184 = vmatpush.msra.mxu0 0.0
    %185 = vmatpush.msra.mxu0 0.0
    %186 = vmatpush.msra.mxu0 0.0
    %187 = vmatpush.msra.mxu0 0.0
    %188 = vmatpush.msra.mxu0 0.0
    %189 = vmatpush.msra.mxu0 0.0
    %190 = vmatpush.msra.mxu0 0.0
    %191 = vmatpush.msra.mxu0 %v174
    %192 = vmatpush.msra.mxu0 %v173
    %193 = vmatpush.msra.mxu0 %v172
    %194 = vmatpush.msra.mxu0 %v171
    %195 = vmatpush.msra.mxu0 %v170
    %196 = vmatpush.msra.mxu0 %v169
    %197 = vmatpush.msra.mxu0 %v168
    %198 = vmatpush.msra.mxu0 %v167
    %199 = vmatmul.f32.gmra.mxu0 %v181
    %v200 = vpop.f32.mrf.mxu0
    %v201 = vadd.f32 %v177, %v200
    %202 = vdwg.mxu0
    %v203 = vmax.f32 %v201, 0.0
    %v204 = vld [vmem:[%s7] sm:$0x1]
    %v205 = vld [vmem:[#allocation2] sm:$0x1]
    %207 = vset.pattern.permute.xlu0 0
    %208 = vperm.xlu0 %207, %v205
    %v209 = vpop.permute.xlu0 %208
    %v211 = vperm.slane %v209, 0
    %v213 = vsel %vm179, %v204, 0
    %v216 = vsel %vm179, %v203, 0
    %218 = vmatpush.xpose.msra.mxu0 0.0
    %219 = vmatpush.xpose.msra.mxu0 0.0
    %220 = vmatpush.xpose.msra.mxu0 0.0
    %221 = vmatpush.xpose.msra.mxu0 0.0
    %222 = vmatpush.xpose.msra.mxu0 0.0
    %223 = vmatpush.xpose.msra.mxu0 0.0
    %224 = vmatpush.xpose.msra.mxu0 0.0
    %225 = vmatpush.xpose.msra.mxu0 0.0
    %226 = vmatpush.xpose.msra.mxu0 0.0
    %227 = vmatpush.xpose.msra.mxu0 0.0
    %228 = vmatpush.xpose.msra.mxu0 0.0
    %229 = vmatpush.xpose.msra.mxu0 0.0
    %230 = vmatpush.xpose.msra.mxu0 0.0
    %231 = vmatpush.xpose.msra.mxu0 0.0
    %232 = vmatpush.xpose.msra.mxu0 0.0
    %233 = vmatpush.xpose.msra.mxu0 %v216
    %234 = vmatmul.f32.gmra.mxu0 %v213
    %v235 = vpop.f32.mrf.mxu0
    %v236 = vadd.f32 %v211, %v235
    %237 = vdwg.mxu0
    %vm238 = vcmask 24576
    %239 = vst.msk [vmem:[#allocation12] sm:$0x1] %vm238, %v236
    // Predicated region
    $region58: #{tpu_custom_call.1} parent=1 // pred_check
      _
    $region59: #{tpu_custom_call.1} parent=1 // pred_check_branch
      %241 = sbr.rel (0) target = $region61
    $region60: #{tpu_custom_call.1} parent=1 // pred_region
      %243 = vsyncadd [#allocation5], 0
      %s245 = sshll.u32 [#allocation12], 4
      %s246 = int_to_ptr.vmem [resolvable:$true] %s245
      %s247 = sshll.u32 %s9, 4
      %s248 = int_to_ptr.hbm [resolvable:$true] %s247
      %250 = dma.vmem_to_hbm [thread:$0]  %s246, 16, %s248, [#allocation5]
    $region61: #{tpu_custom_call.1} parent=1 // pred_fallthru
      _
    // Predicated region
    $region62: #{tpu_custom_call.1} parent=1 // pred_check
      _
    $region63: #{tpu_custom_call.1} parent=1 // pred_check_branch
      %252 = sbr.rel (0) target = $region65
    $region64: #{tpu_custom_call.1} parent=1 // pred_region
      %254 = dma.done [#allocation5], 16
    $region65: #{tpu_custom_call.1} parent=1 // pred_fallthru
      _
    %255 = vsyncpa [#allocation4], 1
    %256 = vsyncpa [#allocation7], 1
    %257 = vsyncpa [#allocation10], 1
    %258 = vsyncpa [#allocation5], 1

</llo_original>
